<compile_context>
chip_gen: v7x
topology: tpu7x:2x2x1
jax: 0.10.0
libtpu: 0.0.40
codegen_flags: <defaults>
</compile_context>

<pallas_src>
import numpy as np
import jax
import jax.numpy as jnp
from jax.experimental import pallas as pl
from jax.experimental.pallas import tpu as pltpu

LN_EPS = 1e-5

_TARGET_ROWS_PER_STEP = 2048          # output rows (= tile_r * Wh) per grid step
_VMEM_LIMIT_BYTES = 32 * 1024 * 1024  # safe on v5e/v6e (128 MiB) and v7x (64 MiB)
_VMEM_TILE_BUDGET = 20 * 1024 * 1024  # buffers + in-kernel temporaries budget


def _num_tensorcores():
    """2 on v7x-class chips (megacore grid sharding), else 1. Defensive."""
    try:
        kind = jax.devices()[0].device_kind.lower()
    except Exception:
        return 1
    return 2 if ("v7" in kind or "7x" in kind) else 1


def _patch_merge_kernel(x_ref, we_ref, wo_ref, b_ref, o_ref):
    # x_ref:  (tile_r, 2, Wh, 2C)  -- dim 1 is the H-parity of the 2x2 patch,
    #                                 trailing 2C packs the two W-parity pixels.
    # we_ref: (2C, 2C) bf16 folded weight for the even-H half (channel order
    #         [dh0dw0 | dh0dw1]); wo_ref: same for the odd-H half.
    # b_ref:  (1, 2C) f32 (= beta @ W^T).
    # o_ref:  (tile_r*Wh, 2C).
    t, _, wh, c2 = x_ref.shape
    n = t * wh
    inv_4c = 1.0 / (2 * c2)

    x = x_ref[...]
    xe = x[:, 0].astype(jnp.float32)          # (t, Wh, 2C)
    xo = x[:, 1].astype(jnp.float32)

    # LayerNorm(4C) statistics from partial sums of the two halves (f32).
    mean = (jnp.sum(xe, axis=-1, keepdims=True)
            + jnp.sum(xo, axis=-1, keepdims=True)) * inv_4c
    ce = xe - mean
    co = xo - mean
    var = (jnp.sum(ce * ce, axis=-1, keepdims=True)
           + jnp.sum(co * co, axis=-1, keepdims=True)) * inv_4c
    rstd = jax.lax.rsqrt(var + LN_EPS)

    # Split-K MXU matmul: bf16 operands, f32 accumulation.
    he = (ce * rstd).astype(we_ref.dtype).reshape(n, c2)
    ho = (co * rstd).astype(wo_ref.dtype).reshape(n, c2)
    out = jnp.dot(he, we_ref[...], preferred_element_type=jnp.float32)
    out = out + jnp.dot(ho, wo_ref[...], preferred_element_type=jnp.float32)
    o_ref[...] = (out + b_ref[...]).astype(o_ref.dtype)


def _pick_tile_r(R, Wh, c2, in_itemsize, out_itemsize, resident_bytes, num_cores):
    """Pick the number of (b, d, hh) row-groups per grid step."""
    wh_pad = -(-Wh // 8) * 8          # sublane padding of the (Wh, 2C) input planes
    c2_pad = -(-c2 // 128) * 128      # lane padding
    per_r = (2 * (2 * wh_pad * c2_pad * in_itemsize)   # input block, double-buffered
             + 2 * (Wh * c2_pad * out_itemsize)        # output block, double-buffered
             + 24 * Wh * c2_pad)                       # f32/bf16 in-kernel temporaries
    budget = max(_VMEM_TILE_BUDGET - 2 * resident_bytes, per_r)
    cap = min(budget // per_r, max(1, _TARGET_ROWS_PER_STEP // Wh), R)
    if num_cores > 1 and R >= 2:      # keep >= 2 grid steps so both TCs get work
        cap = min(cap, pl.cdiv(R, 2))
    cap = max(1, int(cap))

    def ok_sublane(t):
        # Output block is (t*Wh, 2C): sublane dim must be a multiple of 8, or
        # the block must cover the whole row dimension.
        return (t * Wh) % 8 == 0 or t == R

    lo = max(1, (2 * cap) // 3)
    # 1) divisor of R, even step count (megacore round-robin), sublane-clean.
    for t in range(cap, lo - 1, -1):
        if R % t == 0 and ok_sublane(t) and ((R // t) % 2 == 0 or num_cores == 1):
            return t
    # 2) divisor of R, sublane-clean.
    for t in range(cap, lo - 1, -1):
        if R % t == 0 and ok_sublane(t):
            return t
    # 3) any sublane-clean tile (partial boundary block; masked writes discard it).
    for t in range(cap, 0, -1):
        if ok_sublane(t):
            return t
    return R   # single full block (always layout-legal)


def _fused_norm_reduce(xr, w_e, w_o, bias, tile_r, R, Wh, c2):
    """xr: (R, 2, Wh, 2C) -> (R*Wh, 2C) fused gather + LayerNorm + reduction."""
    grid = (pl.cdiv(R, tile_r),)
    itemsize = xr.dtype.itemsize
    bytes_accessed = (xr.size * itemsize                      # input stream
                      + R * Wh * c2 * itemsize                # output stream
                      + w_e.size * w_e.dtype.itemsize
                      + w_o.size * w_o.dtype.itemsize
                      + bias.size * bias.dtype.itemsize)
    flops = 2 * R * Wh * (2 * c2) * c2                        # 4C x 2C matmul
    return pl.pallas_call(
        _patch_merge_kernel,
        out_shape=jax.ShapeDtypeStruct((R * Wh, c2), xr.dtype),
        grid_spec=pltpu.PrefetchScalarGridSpec(
            num_scalar_prefetch=0,
            grid=grid,
            in_specs=[
                # Single contiguous input block per step; parity split in-kernel.
                pl.BlockSpec((tile_r, 2, Wh, c2), lambda i: (i, 0, 0, 0)),
                # Folded weights + bias: constant block index -> VMEM resident.
                pl.BlockSpec(w_e.shape, lambda i: (0, 0)),
                pl.BlockSpec(w_o.shape, lambda i: (0, 0)),
                pl.BlockSpec(bias.shape, lambda i: (0, 0)),
            ],
            # 2-D lane-dense, sublane-clean output slab.
            out_specs=pl.BlockSpec((tile_r * Wh, c2), lambda i: (i, 0)),
        ),
        compiler_params=pltpu.CompilerParams(
            dimension_semantics=("parallel",),
            vmem_limit_bytes=_VMEM_LIMIT_BYTES,
        ),
        cost_estimate=pl.CostEstimate(
            flops=flops, transcendentals=R * Wh, bytes_accessed=bytes_accessed),
    )(xr, w_e, w_o, bias)


def prepare_patch_merging_params(gamma, beta, weight, *, matmul_dtype=jnp.bfloat16):
    """Fold LayerNorm affine into the reduction weight (call once, reuse).

    Returns (w_e (2C,2C), w_o (2C,2C)) in matmul_dtype and bias (1,2C) f32.
    Kernel channel order per half is [dw0 | dw1]; even-H half = PyTorch concat
    blocks [x0 | x2], odd-H half = [x1 | x3].  LN stats are permutation-invariant.
    """
    c4 = gamma.shape[0]
    C = c4 // 4
    c = np.arange(C)
    perm_e = np.concatenate([c, 2 * C + c])        # [x0 | x2] = (dh0,dw0),(dh0,dw1)
    perm_o = np.concatenate([C + c, 3 * C + c])    # [x1 | x3] = (dh1,dw0),(dh1,dw1)
    w_t = weight.astype(jnp.float32).T             # (4C, 2C)
    w_fold = gamma.astype(jnp.float32)[:, None] * w_t
    w_e = w_fold[perm_e].astype(matmul_dtype)
    w_o = w_fold[perm_o].astype(matmul_dtype)
    bias = (beta.astype(jnp.float32) @ w_t).reshape(1, 2 * C)
    return w_e, w_o, bias


def patch_merging_forward(x, gamma, beta, weight, *, prepared_params=None,
                          matmul_dtype=jnp.bfloat16):
    """PatchMerging forward.

    Args:
      x:      (B, D, H, W, C)
      gamma:  (4C,)    LayerNorm weight
      beta:   (4C,)    LayerNorm bias
      weight: (2C, 4C) nn.Linear weight (PyTorch (out, in) convention)
    Returns:
      (B, D, ceil(H/2), ceil(W/2), 2C)
    """
    B, D, H, W, C = x.shape
    if (H % 2 == 1) or (W % 2 == 1):   # matches F.pad(x, (0,0, 0, W%2, 0, H%2))
        x = jnp.pad(x, ((0, 0), (0, 0), (0, H % 2), (0, W % 2), (0, 0)))
        H, W = x.shape[2], x.shape[3]
    Hh, Wh = H // 2, W // 2
    R = B * D * Hh
    c2 = 2 * C

    if prepared_params is None:
        prepared_params = prepare_patch_merging_params(
            gamma, beta, weight, matmul_dtype=matmul_dtype)
    w_e, w_o, bias = prepared_params

    # Metadata-only reshape: (B,D,H,W,C) -> (R, 2, Wh, 2C).  Dim 1 is the H
    # parity of each 2x2 patch; the trailing 2C packs the two W-parity pixels.
    xr = x.reshape(R, 2, Wh, c2)

    resident = (w_e.size * w_e.dtype.itemsize + w_o.size * w_o.dtype.itemsize
                + bias.size * 4)
    tile_r = _pick_tile_r(R, Wh, c2, x.dtype.itemsize, x.dtype.itemsize,
                          resident, _num_tensorcores())
    out2d = _fused_norm_reduce(xr, w_e, w_o, bias, tile_r, R, Wh, c2)
    return out2d.reshape(B, D, Hh, Wh, c2)


if __name__ == "__main__":
    # Small shapes consistent with the module: dim=C=32 so 4C=128 (lane aligned).
    B, D, H, W, C = 2, 2, 8, 8, 32
    key = jax.random.PRNGKey(0)
    kx, kw, kg, kb = jax.random.split(key, 4)

    x = jax.random.normal(kx, (B, D, H, W, C), dtype=jnp.float32)
    gamma = 1.0 + 0.1 * jax.random.normal(kg, (4 * C,), dtype=jnp.float32)
    beta = 0.1 * jax.random.normal(kb, (4 * C,), dtype=jnp.float32)
    weight = jax.random.normal(kw, (2 * C, 4 * C), dtype=jnp.float32) * 0.02

    fwd = jax.jit(patch_merging_forward)
    out = fwd(x, gamma, beta, weight)
    jax.block_until_ready(out)

    # Pure-JAX f32 reference mirroring the PyTorch module.
    x0 = x[:, :, 0::2, 0::2, :]
    x1 = x[:, :, 1::2, 0::2, :]
    x2 = x[:, :, 0::2, 1::2, :]
    x3 = x[:, :, 1::2, 1::2, :]
    xc = jnp.concatenate([x0, x1, x2, x3], axis=-1)
    mu = jnp.mean(xc, axis=-1, keepdims=True)
    var = jnp.mean((xc - mu) ** 2, axis=-1, keepdims=True)
    ref = ((xc - mu) * jax.lax.rsqrt(var + LN_EPS)) * gamma + beta
    ref = jnp.einsum("bdhwc,oc->bdhwo", ref, weight)

    assert out.shape == (B, D, H // 2, W // 2, 2 * C)
    max_err = float(jnp.max(jnp.abs(out - ref)))
    # bf16 MXU operands -> tolerance looser than a pure-f32 matmul.
    assert jnp.allclose(out, ref, atol=3e-2, rtol=3e-2), f"max abs err {max_err}"
    print("KERNEL_OK")
</pallas_src>

<mosaic_0001>
module attributes {stable_mosaic.version = 11 : i64} {
  func.func @_patch_merge_kernel(%arg0: i32, %arg1: memref<16x2x4x64xf32, #tpu.memory_space<vmem>>, %arg2: memref<64x64xbf16, #tpu.memory_space<vmem>>, %arg3: memref<64x64xbf16, #tpu.memory_space<vmem>>, %arg4: memref<1x64xf32, #tpu.memory_space<vmem>>, %arg5: memref<64x64xf32, #tpu.memory_space<vmem>>) attributes {dimension_semantics = [#tpu.dimension_semantics<parallel>], iteration_bounds = array<i64: 1>, scalar_prefetch = 0 : i64, scratch_operands = 0 : i64, tpu.core_type = #tpu.core_type<tc>, window_params = [{transform_indices = @transform_0, window_bounds = array<i64: 16, 2, 4, 64>}, {pipeline_mode = #tpu.pipeline_mode<synchronous>, transform_indices = @transform_1, window_bounds = array<i64: 64, 64>}, {pipeline_mode = #tpu.pipeline_mode<synchronous>, transform_indices = @transform_2, window_bounds = array<i64: 64, 64>}, {pipeline_mode = #tpu.pipeline_mode<synchronous>, transform_indices = @transform_3, window_bounds = array<i64: 1, 64>}, {transform_indices = @transform_4, window_bounds = array<i64: 64, 64>}]} {
    %c0 = arith.constant 0 : index
    %c0_0 = arith.constant 0 : index
    %c0_1 = arith.constant 0 : index
    %c0_2 = arith.constant 0 : index
    %0 = vector.load %arg1[%c0, %c0_0, %c0_1, %c0_2] : memref<16x2x4x64xf32, #tpu.memory_space<vmem>>, vector<16x2x4x64xf32>
    %1 = vector.extract_strided_slice %0 {offsets = [0, 0, 0, 0], sizes = [16, 1, 4, 64], strides = [1, 1, 1, 1]} : vector<16x2x4x64xf32> to vector<16x1x4x64xf32>
    %2 = vector.shape_cast %1 : vector<16x1x4x64xf32> to vector<16x4x64xf32>
    %3 = vector.extract_strided_slice %0 {offsets = [0, 1, 0, 0], sizes = [16, 1, 4, 64], strides = [1, 1, 1, 1]} : vector<16x2x4x64xf32> to vector<16x1x4x64xf32>
    %4 = vector.shape_cast %3 : vector<16x1x4x64xf32> to vector<16x4x64xf32>
    %cst = arith.constant dense<0.000000e+00> : vector<16x4xf32>
    %5 = vector.multi_reduction <add>, %2, %cst [2] : vector<16x4x64xf32> to vector<16x4xf32>
    %6 = vector.shape_cast %5 : vector<16x4xf32> to vector<16x4x1xf32>
    %cst_3 = arith.constant dense<0.000000e+00> : vector<16x4xf32>
    %7 = vector.multi_reduction <add>, %4, %cst_3 [2] : vector<16x4x64xf32> to vector<16x4xf32>
    %8 = vector.shape_cast %7 : vector<16x4xf32> to vector<16x4x1xf32>
    %9 = arith.addf %6, %8 : vector<16x4x1xf32>
    %cst_4 = arith.constant 7.812500e-03 : f32
    %10 = vector.broadcast %cst_4 : f32 to vector<16x4x1xf32>
    %11 = arith.mulf %9, %10 : vector<16x4x1xf32>
    %12 = vector.broadcast %11 : vector<16x4x1xf32> to vector<16x4x64xf32>
    %13 = arith.subf %2, %12 : vector<16x4x64xf32>
    %14 = vector.broadcast %11 : vector<16x4x1xf32> to vector<16x4x64xf32>
    %15 = arith.subf %4, %14 : vector<16x4x64xf32>
    %16 = arith.mulf %13, %13 : vector<16x4x64xf32>
    %cst_5 = arith.constant dense<0.000000e+00> : vector<16x4xf32>
    %17 = vector.multi_reduction <add>, %16, %cst_5 [2] : vector<16x4x64xf32> to vector<16x4xf32>
    %18 = vector.shape_cast %17 : vector<16x4xf32> to vector<16x4x1xf32>
    %19 = arith.mulf %15, %15 : vector<16x4x64xf32>
    %cst_6 = arith.constant dense<0.000000e+00> : vector<16x4xf32>
    %20 = vector.multi_reduction <add>, %19, %cst_6 [2] : vector<16x4x64xf32> to vector<16x4xf32>
    %21 = vector.shape_cast %20 : vector<16x4xf32> to vector<16x4x1xf32>
    %22 = arith.addf %18, %21 : vector<16x4x1xf32>
    %cst_7 = arith.constant 7.812500e-03 : f32
    %23 = vector.broadcast %cst_7 : f32 to vector<16x4x1xf32>
    %24 = arith.mulf %22, %23 : vector<16x4x1xf32>
    %cst_8 = arith.constant 9.99999974E-6 : f32
    %25 = vector.broadcast %cst_8 : f32 to vector<16x4x1xf32>
    %26 = arith.addf %24, %25 : vector<16x4x1xf32>
    %27 = math.rsqrt %26 : vector<16x4x1xf32>
    %28 = vector.broadcast %27 : vector<16x4x1xf32> to vector<16x4x64xf32>
    %29 = arith.mulf %13, %28 : vector<16x4x64xf32>
    %30 = arith.truncf %29 : vector<16x4x64xf32> to vector<16x4x64xbf16>
    %31 = vector.shape_cast %30 : vector<16x4x64xbf16> to vector<64x64xbf16>
    %32 = vector.broadcast %27 : vector<16x4x1xf32> to vector<16x4x64xf32>
    %33 = arith.mulf %15, %32 : vector<16x4x64xf32>
    %34 = arith.truncf %33 : vector<16x4x64xf32> to vector<16x4x64xbf16>
    %35 = vector.shape_cast %34 : vector<16x4x64xbf16> to vector<64x64xbf16>
    %c0_9 = arith.constant 0 : index
    %c0_10 = arith.constant 0 : index
    %36 = vector.load %arg2[%c0_9, %c0_10] : memref<64x64xbf16, #tpu.memory_space<vmem>>, vector<64x64xbf16>
    %cst_11 = arith.constant dense<0.000000e+00> : vector<64x64xf32>
    %37 = tpu.matmul %31, %36, %cst_11 {dimension_numbers = #tpu.dot_dimension_numbers<[1], [0], [0], [1], [0, 0, 1, 1], [], []>} : vector<64x64xbf16>, vector<64x64xbf16>, vector<64x64xf32> -> vector<64x64xf32>
    %c0_12 = arith.constant 0 : index
    %c0_13 = arith.constant 0 : index
    %38 = vector.load %arg3[%c0_12, %c0_13] : memref<64x64xbf16, #tpu.memory_space<vmem>>, vector<64x64xbf16>
    %cst_14 = arith.constant dense<0.000000e+00> : vector<64x64xf32>
    %39 = tpu.matmul %35, %38, %cst_14 {dimension_numbers = #tpu.dot_dimension_numbers<[1], [0], [0], [1], [0, 0, 1, 1], [], []>} : vector<64x64xbf16>, vector<64x64xbf16>, vector<64x64xf32> -> vector<64x64xf32>
    %40 = arith.addf %37, %39 : vector<64x64xf32>
    %c0_15 = arith.constant 0 : index
    %c0_16 = arith.constant 0 : index
    %41 = vector.load %arg4[%c0_15, %c0_16] : memref<1x64xf32, #tpu.memory_space<vmem>>, vector<1x64xf32>
    %42 = vector.broadcast %41 : vector<1x64xf32> to vector<64x64xf32>
    %43 = arith.addf %40, %42 : vector<64x64xf32>
    %c0_17 = arith.constant 0 : index
    %c0_18 = arith.constant 0 : index
    %44 = vector.load %arg5[%c0_17, %c0_18] : memref<64x64xf32, #tpu.memory_space<vmem>>, vector<64x64xf32>
    tpu.vector_store %arg5[%c0_17, %c0_18], %43 {strides = array<i32>} : memref<64x64xf32, #tpu.memory_space<vmem>>, vector<64x64xf32>,
    return
  }
  func.func @transform_0(%arg0: i32) -> (i32, i32, i32, i32) {
    %c0_i32 = arith.constant 0 : i32
    %c0_i32_0 = arith.constant 0 : i32
    %c0_i32_1 = arith.constant 0 : i32
    %c0_i32_2 = arith.constant 0 : i32
    return %arg0, %c0_i32, %c0_i32_0, %c0_i32_1 : i32, i32, i32, i32
  }
  func.func @transform_1(%arg0: i32) -> (i32, i32) {
    %c0_i32 = arith.constant 0 : i32
    %c0_i32_0 = arith.constant 0 : i32
    %c0_i32_1 = arith.constant 0 : i32
    return %c0_i32, %c0_i32_0 : i32, i32
  }
  func.func @transform_2(%arg0: i32) -> (i32, i32) {
    %c0_i32 = arith.constant 0 : i32
    %c0_i32_0 = arith.constant 0 : i32
    %c0_i32_1 = arith.constant 0 : i32
    return %c0_i32, %c0_i32_0 : i32, i32
  }
  func.func @transform_3(%arg0: i32) -> (i32, i32) {
    %c0_i32 = arith.constant 0 : i32
    %c0_i32_0 = arith.constant 0 : i32
    %c0_i32_1 = arith.constant 0 : i32
    return %c0_i32, %c0_i32_0 : i32, i32
  }
  func.func @transform_4(%arg0: i32) -> (i32, i32) {
    %c0_i32 = arith.constant 0 : i32
    %c0_i32_0 = arith.constant 0 : i32
    return %arg0, %c0_i32 : i32, i32
  }
}

</mosaic_0001>

<llo_original>
// kernel: patch_merging_forward.1
$region0: #{patch_merging_forward.1}
  #allocation0 [shape = 'u32[]', space=smem, size = 0x4, offset = 0x4, fixed_abs, tag = 'smem constant byte address 0x4 - core index']
  #allocation1 [shape = 'u32[144,128]{1,0:T(1,128)}', space=vmem, size = 0x12000, scoped, tag = 'internal scratch']
  %s0 = inlined_call_operand.vmem [shape: f32[16,2,4,64], index: 0, kind: input, shape index: {}]
  %s1 = inlined_call_operand.vmem [shape: bf16[64,64], index: 1, kind: input, shape index: {}]
  %s2 = inlined_call_operand.vmem [shape: bf16[64,64], index: 2, kind: input, shape index: {}]
  %s3 = inlined_call_operand.vmem [shape: f32[1,64], index: 3, kind: input, shape index: {}]
  %s4 = inlined_call_operand.hbm [shape: f32[64,64], index: 4, kind: output, shape index: {}]
  %s5 = sld [smem:[#allocation0]]
  $region26: #{patch_merging_forward.1} parent=0
    _
  %s7 = ssub.s32 1, %s5
  %s8 = scalar_select 0, %s7, %s5
  $region1: #{patch_merging_forward.1} parent=0
    #allocation2 [shape = 'u8[32768]{0}', space=vmem, size = 0x8000, scoped, tag = 'output window, operand 0, single buffered']
    #allocation3 [shape = 's32[1]{0}', space=sflag, size = 0x4, scoped, tag = 'scoped memory for patch_merging_forward.1']
    %9 = vsyncpa [#allocation3], 0
    // Predicated region
    $region2: #{patch_merging_forward.1} parent=1 // pred_check
      _
    $region3: #{patch_merging_forward.1} parent=1 // pred_check_branch
      %11 = sbr.rel (0) target = $region5
    $region4: #{patch_merging_forward.1} parent=1 // pred_region
      _
    $region5: #{patch_merging_forward.1} parent=1 // pred_fallthru
      _
    // Predicated region
    $region6: #{patch_merging_forward.1} parent=1 // pred_check
      _
    $region7: #{patch_merging_forward.1} parent=1 // pred_check_branch
      %13 = sbr.rel (0) target = $region9
    $region8: #{patch_merging_forward.1} parent=1 // pred_region
      _
    $region9: #{patch_merging_forward.1} parent=1 // pred_fallthru
      _
    // Predicated region
    $region10: #{patch_merging_forward.1} parent=1 // pred_check
      _
    $region11: #{patch_merging_forward.1} parent=1 // pred_check_branch
      %15 = sbr.rel (0) target = $region13
    $region12: #{patch_merging_forward.1} parent=1 // pred_region
      _
    $region13: #{patch_merging_forward.1} parent=1 // pred_fallthru
      _
    // Predicated region
    $region14: #{patch_merging_forward.1} parent=1 // pred_check
      _
    $region15: #{patch_merging_forward.1} parent=1 // pred_check_branch
      %17 = sbr.rel (0) target = $region17
    $region16: #{patch_merging_forward.1} parent=1 // pred_region
      _
    $region17: #{patch_merging_forward.1} parent=1 // pred_fallthru
      _
    %v19 = vld [vmem:[%s0] sm:$0xf]
    %v20 = vld [vmem:[%s0 + $0x4] sm:$0xf]
    %v21 = vld [vmem:[%s0 + $0x8] sm:$0xf]
    %v22 = vld [vmem:[%s0 + $0xc] sm:$0xf]
    %v23 = vld [vmem:[%s0 + $0x10] sm:$0xf]
    %v24 = vld [vmem:[%s0 + $0x14] sm:$0xf]
    %v25 = vld [vmem:[%s0 + $0x18] sm:$0xf]
    %v26 = vld [vmem:[%s0 + $0x1c] sm:$0xf]
    %v27 = vld [vmem:[%s0 + $0x20] sm:$0xf]
    %v28 = vld [vmem:[%s0 + $0x24] sm:$0xf]
    %v29 = vld [vmem:[%s0 + $0x28] sm:$0xf]
    %v30 = vld [vmem:[%s0 + $0x2c] sm:$0xf]
    %v31 = vld [vmem:[%s0 + $0x30] sm:$0xf]
    %v32 = vld [vmem:[%s0 + $0x34] sm:$0xf]
    %v33 = vld [vmem:[%s0 + $0x38] sm:$0xf]
    %v34 = vld [vmem:[%s0 + $0x3c] sm:$0xf]
    %v35 = vld [vmem:[%s0 + $0x40] sm:$0xf]
    %v36 = vld [vmem:[%s0 + $0x44] sm:$0xf]
    %v37 = vld [vmem:[%s0 + $0x48] sm:$0xf]
    %v38 = vld [vmem:[%s0 + $0x4c] sm:$0xf]
    %v39 = vld [vmem:[%s0 + $0x50] sm:$0xf]
    %v40 = vld [vmem:[%s0 + $0x54] sm:$0xf]
    %v41 = vld [vmem:[%s0 + $0x58] sm:$0xf]
    %v42 = vld [vmem:[%s0 + $0x5c] sm:$0xf]
    %v43 = vld [vmem:[%s0 + $0x60] sm:$0xf]
    %v44 = vld [vmem:[%s0 + $0x64] sm:$0xf]
    %v45 = vld [vmem:[%s0 + $0x68] sm:$0xf]
    %v46 = vld [vmem:[%s0 + $0x6c] sm:$0xf]
    %v47 = vld [vmem:[%s0 + $0x70] sm:$0xf]
    %v48 = vld [vmem:[%s0 + $0x74] sm:$0xf]
    %v49 = vld [vmem:[%s0 + $0x78] sm:$0xf]
    %v50 = vld [vmem:[%s0 + $0x7c] sm:$0xf]
    %vm51 = vcmask 519168
    %v52 = vsel %vm51, %v19, 0.0
    %53 = vadd.xlane.f32.xlu0 %v52
    %v54 = vpop.xlane.xlu0 %53
    %v55 = vsel %vm51, %v21, 0.0
    %56 = vadd.xlane.f32.xlu0 %v55
    %v57 = vpop.xlane.xlu0 %56
    %v58 = vsel %vm51, %v23, 0.0
    %59 = vadd.xlane.f32.xlu0 %v58
    %v60 = vpop.xlane.xlu0 %59
    %v61 = vsel %vm51, %v25, 0.0
    %62 = vadd.xlane.f32.xlu0 %v61
    %v63 = vpop.xlane.xlu0 %62
    %v64 = vsel %vm51, %v27, 0.0
    %65 = vadd.xlane.f32.xlu0 %v64
    %v66 = vpop.xlane.xlu0 %65
    %v67 = vsel %vm51, %v29, 0.0
    %68 = vadd.xlane.f32.xlu0 %v67
    %v69 = vpop.xlane.xlu0 %68
    %v70 = vsel %vm51, %v31, 0.0
    %71 = vadd.xlane.f32.xlu0 %v70
    %v72 = vpop.xlane.xlu0 %71
    %v73 = vsel %vm51, %v33, 0.0
    %74 = vadd.xlane.f32.xlu0 %v73
    %v75 = vpop.xlane.xlu0 %74
    %v76 = vsel %vm51, %v35, 0.0
    %77 = vadd.xlane.f32.xlu0 %v76
    %v78 = vpop.xlane.xlu0 %77
    %v79 = vsel %vm51, %v37, 0.0
    %80 = vadd.xlane.f32.xlu0 %v79
    %v81 = vpop.xlane.xlu0 %80
    %v82 = vsel %vm51, %v39, 0.0
    %83 = vadd.xlane.f32.xlu0 %v82
    %v84 = vpop.xlane.xlu0 %83
    %v85 = vsel %vm51, %v41, 0.0
    %86 = vadd.xlane.f32.xlu0 %v85
    %v87 = vpop.xlane.xlu0 %86
    %v88 = vsel %vm51, %v43, 0.0
    %89 = vadd.xlane.f32.xlu0 %v88
    %v90 = vpop.xlane.xlu0 %89
    %v91 = vsel %vm51, %v45, 0.0
    %92 = vadd.xlane.f32.xlu0 %v91
    %v93 = vpop.xlane.xlu0 %92
    %v94 = vsel %vm51, %v47, 0.0
    %95 = vadd.xlane.f32.xlu0 %v94
    %v96 = vpop.xlane.xlu0 %95
    %v97 = vsel %vm51, %v49, 0.0
    %98 = vadd.xlane.f32.xlu0 %v97
    %v99 = vpop.xlane.xlu0 %98
    %v100 = vsel %vm51, %v20, 0.0
    %101 = vadd.xlane.f32.xlu0 %v100
    %v102 = vpop.xlane.xlu0 %101
    %v103 = vsel %vm51, %v22, 0.0
    %104 = vadd.xlane.f32.xlu0 %v103
    %v105 = vpop.xlane.xlu0 %104
    %v106 = vsel %vm51, %v24, 0.0
    %107 = vadd.xlane.f32.xlu0 %v106
    %v108 = vpop.xlane.xlu0 %107
    %v109 = vsel %vm51, %v26, 0.0
    %110 = vadd.xlane.f32.xlu0 %v109
    %v111 = vpop.xlane.xlu0 %110
    %v112 = vsel %vm51, %v28, 0.0
    %113 = vadd.xlane.f32.xlu0 %v112
    %v114 = vpop.xlane.xlu0 %113
    %v115 = vsel %vm51, %v30, 0.0
    %116 = vadd.xlane.f32.xlu0 %v115
    %v117 = vpop.xlane.xlu0 %116
    %v118 = vsel %vm51, %v32, 0.0
    %119 = vadd.xlane.f32.xlu0 %v118
    %v120 = vpop.xlane.xlu0 %119
    %v121 = vsel %vm51, %v34, 0.0
    %122 = vadd.xlane.f32.xlu0 %v121
    %v123 = vpop.xlane.xlu0 %122
    %v124 = vsel %vm51, %v36, 0.0
    %125 = vadd.xlane.f32.xlu0 %v124
    %v126 = vpop.xlane.xlu0 %125
    %v127 = vsel %vm51, %v38, 0.0
    %128 = vadd.xlane.f32.xlu0 %v127
    %v129 = vpop.xlane.xlu0 %128
    %v130 = vsel %vm51, %v40, 0.0
    %131 = vadd.xlane.f32.xlu0 %v130
    %v132 = vpop.xlane.xlu0 %131
    %v133 = vsel %vm51, %v42, 0.0
    %134 = vadd.xlane.f32.xlu0 %v133
    %v135 = vpop.xlane.xlu0 %134
    %v136 = vsel %vm51, %v44, 0.0
    %137 = vadd.xlane.f32.xlu0 %v136
    %v138 = vpop.xlane.xlu0 %137
    %v139 = vsel %vm51, %v46, 0.0
    %140 = vadd.xlane.f32.xlu0 %v139
    %v141 = vpop.xlane.xlu0 %140
    %v142 = vsel %vm51, %v48, 0.0
    %143 = vadd.xlane.f32.xlu0 %v142
    %v144 = vpop.xlane.xlu0 %143
    %v145 = vsel %vm51, %v50, 0.0
    %146 = vadd.xlane.f32.xlu0 %v145
    %v147 = vpop.xlane.xlu0 %146
    %v148 = vadd.f32 %v54, %v102
    %v149 = vadd.f32 %v57, %v105
    %v150 = vadd.f32 %v60, %v108
    %v151 = vadd.f32 %v63, %v111
    %v152 = vadd.f32 %v66, %v114
    %v153 = vadd.f32 %v69, %v117
    %v154 = vadd.f32 %v72, %v120
    %v155 = vadd.f32 %v75, %v123
    %v156 = vadd.f32 %v78, %v126
    %v157 = vadd.f32 %v81, %v129
    %v158 = vadd.f32 %v84, %v132
    %v159 = vadd.f32 %v87, %v135
    %v160 = vadd.f32 %v90, %v138
    %v161 = vadd.f32 %v93, %v141
    %v162 = vadd.f32 %v96, %v144
    %v163 = vadd.f32 %v99, %v147
    %v164 = vmul.f32 %v148, 0.0078125
    %v165 = vmul.f32 %v149, 0.0078125
    %v166 = vmul.f32 %v150, 0.0078125
    %v167 = vmul.f32 %v151, 0.0078125
    %v168 = vmul.f32 %v152, 0.0078125
    %v169 = vmul.f32 %v153, 0.0078125
    %v170 = vmul.f32 %v154, 0.0078125
    %v171 = vmul.f32 %v155, 0.0078125
    %v172 = vmul.f32 %v156, 0.0078125
    %v173 = vmul.f32 %v157, 0.0078125
    %v174 = vmul.f32 %v158, 0.0078125
    %v175 = vmul.f32 %v159, 0.0078125
    %v176 = vmul.f32 %v160, 0.0078125
    %v177 = vmul.f32 %v161, 0.0078125
    %v178 = vmul.f32 %v162, 0.0078125
    %v179 = vmul.f32 %v163, 0.0078125
    %v180 = vsub.f32 %v19, %v164
    %v181 = vsub.f32 %v21, %v165
    %v182 = vsub.f32 %v23, %v166
    %v183 = vsub.f32 %v25, %v167
    %v184 = vsub.f32 %v27, %v168
    %v185 = vsub.f32 %v29, %v169
    %v186 = vsub.f32 %v31, %v170
    %v187 = vsub.f32 %v33, %v171
    %v188 = vsub.f32 %v35, %v172
    %v189 = vsub.f32 %v37, %v173
    %v190 = vsub.f32 %v39, %v174
    %v191 = vsub.f32 %v41, %v175
    %v192 = vsub.f32 %v43, %v176
    %v193 = vsub.f32 %v45, %v177
    %v194 = vsub.f32 %v47, %v178
    %v195 = vsub.f32 %v49, %v179
    %v196 = vsub.f32 %v20, %v164
    %v197 = vsub.f32 %v22, %v165
    %v198 = vsub.f32 %v24, %v166
    %v199 = vsub.f32 %v26, %v167
    %v200 = vsub.f32 %v28, %v168
    %v201 = vsub.f32 %v30, %v169
    %v202 = vsub.f32 %v32, %v170
    %v203 = vsub.f32 %v34, %v171
    %v204 = vsub.f32 %v36, %v172
    %v205 = vsub.f32 %v38, %v173
    %v206 = vsub.f32 %v40, %v174
    %v207 = vsub.f32 %v42, %v175
    %v208 = vsub.f32 %v44, %v176
    %v209 = vsub.f32 %v46, %v177
    %v210 = vsub.f32 %v48, %v178
    %v211 = vsub.f32 %v50, %v179
    %v212 = vmul.f32 %v180, %v180
    %v213 = vmul.f32 %v181, %v181
    %v214 = vmul.f32 %v182, %v182
    %v215 = vmul.f32 %v183, %v183
    %v216 = vmul.f32 %v184, %v184
    %v217 = vmul.f32 %v185, %v185
    %v218 = vmul.f32 %v186, %v186
    %v219 = vmul.f32 %v187, %v187
    %v220 = vmul.f32 %v188, %v188
    %v221 = vmul.f32 %v189, %v189
    %v222 = vmul.f32 %v190, %v190
    %v223 = vmul.f32 %v191, %v191
    %v224 = vmul.f32 %v192, %v192
    %v225 = vmul.f32 %v193, %v193
    %v226 = vmul.f32 %v194, %v194
    %v227 = vmul.f32 %v195, %v195
    %v228 = vsel %vm51, %v212, 0.0
    %229 = vadd.xlane.f32.xlu0 %v228
    %v230 = vpop.xlane.xlu0 %229
    %v231 = vsel %vm51, %v213, 0.0
    %232 = vadd.xlane.f32.xlu0 %v231
    %v233 = vpop.xlane.xlu0 %232
    %v234 = vsel %vm51, %v214, 0.0
    %235 = vadd.xlane.f32.xlu0 %v234
    %v236 = vpop.xlane.xlu0 %235
    %v237 = vsel %vm51, %v215, 0.0
    %238 = vadd.xlane.f32.xlu0 %v237
    %v239 = vpop.xlane.xlu0 %238
    %v240 = vsel %vm51, %v216, 0.0
    %241 = vadd.xlane.f32.xlu0 %v240
    %v242 = vpop.xlane.xlu0 %241
    %v243 = vsel %vm51, %v217, 0.0
    %244 = vadd.xlane.f32.xlu0 %v243
    %v245 = vpop.xlane.xlu0 %244
    %v246 = vsel %vm51, %v218, 0.0
    %247 = vadd.xlane.f32.xlu0 %v246
    %v248 = vpop.xlane.xlu0 %247
    %v249 = vsel %vm51, %v219, 0.0
    %250 = vadd.xlane.f32.xlu0 %v249
    %v251 = vpop.xlane.xlu0 %250
    %v252 = vsel %vm51, %v220, 0.0
    %253 = vadd.xlane.f32.xlu0 %v252
    %v254 = vpop.xlane.xlu0 %253
    %v255 = vsel %vm51, %v221, 0.0
    %256 = vadd.xlane.f32.xlu0 %v255
    %v257 = vpop.xlane.xlu0 %256
    %v258 = vsel %vm51, %v222, 0.0
    %259 = vadd.xlane.f32.xlu0 %v258
    %v260 = vpop.xlane.xlu0 %259
    %v261 = vsel %vm51, %v223, 0.0
    %262 = vadd.xlane.f32.xlu0 %v261
    %v263 = vpop.xlane.xlu0 %262
    %v264 = vsel %vm51, %v224, 0.0
    %265 = vadd.xlane.f32.xlu0 %v264
    %v266 = vpop.xlane.xlu0 %265
    %v267 = vsel %vm51, %v225, 0.0
    %268 = vadd.xlane.f32.xlu0 %v267
    %v269 = vpop.xlane.xlu0 %268
    %v270 = vsel %vm51, %v226, 0.0
    %271 = vadd.xlane.f32.xlu0 %v270
    %v272 = vpop.xlane.xlu0 %271
    %v273 = vsel %vm51, %v227, 0.0
    %274 = vadd.xlane.f32.xlu0 %v273
    %v275 = vpop.xlane.xlu0 %274
    %v276 = vmul.f32 %v196, %v196
    %v277 = vmul.f32 %v197, %v197
    %v278 = vmul.f32 %v198, %v198
    %v279 = vmul.f32 %v199, %v199
    %v280 = vmul.f32 %v200, %v200
    %v281 = vmul.f32 %v201, %v201
    %v282 = vmul.f32 %v202, %v202
    %v283 = vmul.f32 %v203, %v203
    %v284 = vmul.f32 %v204, %v204
    %v285 = vmul.f32 %v205, %v205
    %v286 = vmul.f32 %v206, %v206
    %v287 = vmul.f32 %v207, %v207
    %v288 = vmul.f32 %v208, %v208
    %v289 = vmul.f32 %v209, %v209
    %v290 = vmul.f32 %v210, %v210
    %v291 = vmul.f32 %v211, %v211
    %v292 = vsel %vm51, %v276, 0.0
    %293 = vadd.xlane.f32.xlu0 %v292
    %v294 = vpop.xlane.xlu0 %293
    %v295 = vsel %vm51, %v277, 0.0
    %296 = vadd.xlane.f32.xlu0 %v295
    %v297 = vpop.xlane.xlu0 %296
    %v298 = vsel %vm51, %v278, 0.0
    %299 = vadd.xlane.f32.xlu0 %v298
    %v300 = vpop.xlane.xlu0 %299
    %v301 = vsel %vm51, %v279, 0.0
    %302 = vadd.xlane.f32.xlu0 %v301
    %v303 = vpop.xlane.xlu0 %302
    %v304 = vsel %vm51, %v280, 0.0
    %305 = vadd.xlane.f32.xlu0 %v304
    %v306 = vpop.xlane.xlu0 %305
    %v307 = vsel %vm51, %v281, 0.0
    %308 = vadd.xlane.f32.xlu0 %v307
    %v309 = vpop.xlane.xlu0 %308
    %v310 = vsel %vm51, %v282, 0.0
    %311 = vadd.xlane.f32.xlu0 %v310
    %v312 = vpop.xlane.xlu0 %311
    %v313 = vsel %vm51, %v283, 0.0
    %314 = vadd.xlane.f32.xlu0 %v313
    %v315 = vpop.xlane.xlu0 %314
    %v316 = vsel %vm51, %v284, 0.0
    %317 = vadd.xlane.f32.xlu0 %v316
    %v318 = vpop.xlane.xlu0 %317
    %v319 = vsel %vm51, %v285, 0.0
    %320 = vadd.xlane.f32.xlu0 %v319
    %v321 = vpop.xlane.xlu0 %320
    %v322 = vsel %vm51, %v286, 0.0
    %323 = vadd.xlane.f32.xlu0 %v322
    %v324 = vpop.xlane.xlu0 %323
    %v325 = vsel %vm51, %v287, 0.0
    %326 = vadd.xlane.f32.xlu0 %v325
    %v327 = vpop.xlane.xlu0 %326
    %v328 = vsel %vm51, %v288, 0.0
    %329 = vadd.xlane.f32.xlu0 %v328
    %v330 = vpop.xlane.xlu0 %329
    %v331 = vsel %vm51, %v289, 0.0
    %332 = vadd.xlane.f32.xlu0 %v331
    %v333 = vpop.xlane.xlu0 %332
    %v334 = vsel %vm51, %v290, 0.0
    %335 = vadd.xlane.f32.xlu0 %v334
    %v336 = vpop.xlane.xlu0 %335
    %v337 = vsel %vm51, %v291, 0.0
    %338 = vadd.xlane.f32.xlu0 %v337
    %v339 = vpop.xlane.xlu0 %338
    %v340 = vadd.f32 %v230, %v294
    %v341 = vadd.f32 %v233, %v297
    %v342 = vadd.f32 %v236, %v300
    %v343 = vadd.f32 %v239, %v303
    %v344 = vadd.f32 %v242, %v306
    %v345 = vadd.f32 %v245, %v309
    %v346 = vadd.f32 %v248, %v312
    %v347 = vadd.f32 %v251, %v315
    %v348 = vadd.f32 %v254, %v318
    %v349 = vadd.f32 %v257, %v321
    %v350 = vadd.f32 %v260, %v324
    %v351 = vadd.f32 %v263, %v327
    %v352 = vadd.f32 %v266, %v330
    %v353 = vadd.f32 %v269, %v333
    %v354 = vadd.f32 %v272, %v336
    %v355 = vadd.f32 %v275, %v339
    %v356 = vmul.f32 %v340, 0.0078125
    %v357 = vmul.f32 %v341, 0.0078125
    %v358 = vmul.f32 %v342, 0.0078125
    %v359 = vmul.f32 %v343, 0.0078125
    %v360 = vmul.f32 %v344, 0.0078125
    %v361 = vmul.f32 %v345, 0.0078125
    %v362 = vmul.f32 %v346, 0.0078125
    %v363 = vmul.f32 %v347, 0.0078125
    %v364 = vmul.f32 %v348, 0.0078125
    %v365 = vmul.f32 %v349, 0.0078125
    %v366 = vmul.f32 %v350, 0.0078125
    %v367 = vmul.f32 %v351, 0.0078125
    %v368 = vmul.f32 %v352, 0.0078125
    %v369 = vmul.f32 %v353, 0.0078125
    %v370 = vmul.f32 %v354, 0.0078125
    %v371 = vmul.f32 %v355, 0.0078125
    %v372 = vadd.f32 %v356, 1e-05
    %v373 = vadd.f32 %v357, 1e-05
    %v374 = vadd.f32 %v358, 1e-05
    %v375 = vadd.f32 %v359, 1e-05
    %v376 = vadd.f32 %v360, 1e-05
    %v377 = vadd.f32 %v361, 1e-05
    %v378 = vadd.f32 %v362, 1e-05
    %v379 = vadd.f32 %v363, 1e-05
    %v380 = vadd.f32 %v364, 1e-05
    %v381 = vadd.f32 %v365, 1e-05
    %v382 = vadd.f32 %v366, 1e-05
    %v383 = vadd.f32 %v367, 1e-05
    %v384 = vadd.f32 %v368, 1e-05
    %v385 = vadd.f32 %v369, 1e-05
    %v386 = vadd.f32 %v370, 1e-05
    %v387 = vadd.f32 %v371, 1e-05
    %v388 = vrsqrt.pop %v372
    %v389 = vrsqrt.pop %v373
    %v390 = vrsqrt.pop %v374
    %v391 = vrsqrt.pop %v375
    %v392 = vrsqrt.pop %v376
    %v393 = vrsqrt.pop %v377
    %v394 = vrsqrt.pop %v378
    %v395 = vrsqrt.pop %v379
    %v396 = vrsqrt.pop %v380
    %v397 = vrsqrt.pop %v381
    %v398 = vrsqrt.pop %v382
    %v399 = vrsqrt.pop %v383
    %v400 = vrsqrt.pop %v384
    %v401 = vrsqrt.pop %v385
    %v402 = vrsqrt.pop %v386
    %v403 = vrsqrt.pop %v387
    %v404 = vmul.f32 %v180, %v388
    %v405 = vmul.f32 %v181, %v389
    %v406 = vmul.f32 %v182, %v390
    %v407 = vmul.f32 %v183, %v391
    %v408 = vmul.f32 %v184, %v392
    %v409 = vmul.f32 %v185, %v393
    %v410 = vmul.f32 %v186, %v394
    %v411 = vmul.f32 %v187, %v395
    %v412 = vmul.f32 %v188, %v396
    %v413 = vmul.f32 %v189, %v397
    %v414 = vmul.f32 %v190, %v398
    %v415 = vmul.f32 %v191, %v399
    %v416 = vmul.f32 %v192, %v400
    %v417 = vmul.f32 %v193, %v401
    %v418 = vmul.f32 %v194, %v402
    %v419 = vmul.f32 %v195, %v403
    %v420 = vpack.c.bf16 %v404, %v404
    %v421 = vpack.c.bf16 %v405, %v405
    %v422 = vpack.c.bf16 %v406, %v406
    %v423 = vpack.c.bf16 %v407, %v407
    %v424 = vpack.c.bf16 %v408, %v408
    %v425 = vpack.c.bf16 %v409, %v409
    %v426 = vpack.c.bf16 %v410, %v410
    %v427 = vpack.c.bf16 %v411, %v411
    %v428 = vpack.c.bf16 %v412, %v412
    %v429 = vpack.c.bf16 %v413, %v413
    %v430 = vpack.c.bf16 %v414, %v414
    %v431 = vpack.c.bf16 %v415, %v415
    %v432 = vpack.c.bf16 %v416, %v416
    %v433 = vpack.c.bf16 %v417, %v417
    %v434 = vpack.c.bf16 %v418, %v418
    %v435 = vpack.c.bf16 %v419, %v419
    %v436 = vmul.f32 %v196, %v388
    %v437 = vmul.f32 %v197, %v389
    %v438 = vmul.f32 %v198, %v390
    %v439 = vmul.f32 %v199, %v391
    %v440 = vmul.f32 %v200, %v392
    %v441 = vmul.f32 %v201, %v393
    %v442 = vmul.f32 %v202, %v394
    %v443 = vmul.f32 %v203, %v395
    %v444 = vmul.f32 %v204, %v396
    %v445 = vmul.f32 %v205, %v397
    %v446 = vmul.f32 %v206, %v398
    %v447 = vmul.f32 %v207, %v399
    %v448 = vmul.f32 %v208, %v400
    %v449 = vmul.f32 %v209, %v401
    %v450 = vmul.f32 %v210, %v402
    %v451 = vmul.f32 %v211, %v403
    %v452 = vpack.c.bf16 %v436, %v436
    %v453 = vpack.c.bf16 %v437, %v437
    %v454 = vpack.c.bf16 %v438, %v438
    %v455 = vpack.c.bf16 %v439, %v439
    %v456 = vpack.c.bf16 %v440, %v440
    %v457 = vpack.c.bf16 %v441, %v441
    %v458 = vpack.c.bf16 %v442, %v442
    %v459 = vpack.c.bf16 %v443, %v443
    %v460 = vpack.c.bf16 %v444, %v444
    %v461 = vpack.c.bf16 %v445, %v445
    %v462 = vpack.c.bf16 %v446, %v446
    %v463 = vpack.c.bf16 %v447, %v447
    %v464 = vpack.c.bf16 %v448, %v448
    %v465 = vpack.c.bf16 %v449, %v449
    %v466 = vpack.c.bf16 %v450, %v450
    %v467 = vpack.c.bf16 %v451, %v451
    %v468 = vld [vmem:[%s1] sm:$0xf]
    %v469 = vld [vmem:[%s1 + $0x4] sm:$0xf]
    %v470 = vld [vmem:[%s1 + $0x8] sm:$0xf]
    %v471 = vld [vmem:[%s1 + $0xc] sm:$0xf]
    %v472 = vld [vmem:[%s1 + $0x10] sm:$0xf]
    %v473 = vld [vmem:[%s1 + $0x14] sm:$0xf]
    %v474 = vld [vmem:[%s1 + $0x18] sm:$0xf]
    %v475 = vld [vmem:[%s1 + $0x1c] sm:$0xf]
    %v476 = vld [vmem:[%s2] sm:$0xf]
    %v477 = vld [vmem:[%s2 + $0x4] sm:$0xf]
    %v478 = vld [vmem:[%s2 + $0x8] sm:$0xf]
    %v479 = vld [vmem:[%s2 + $0xc] sm:$0xf]
    %v480 = vld [vmem:[%s2 + $0x10] sm:$0xf]
    %v481 = vld [vmem:[%s2 + $0x14] sm:$0xf]
    %v482 = vld [vmem:[%s2 + $0x18] sm:$0xf]
    %v483 = vld [vmem:[%s2 + $0x1c] sm:$0xf]
    %v500 = vcombine.low %v452, %v453
    %v501 = vcombine.low %v454, %v455
    %v503 = vunpack.c.l.s4 1983009808
    %v504 = vunpack.c.0.s8 %v503
    %v505 = vlaneseq
    %v506 = vshrl.u32 %v505, 7
    %v507 = vsub.s32 %v504, %v506
    %v508 = vrot.slane %v500, %v507
    %v510 = vunpack.c.l.s4 1983009808
    %v511 = vunpack.c.0.s8 %v510
    %v512 = vlaneseq
    %v513 = vshrl.u32 %v512, 7
    %v514 = vsub.s32 %v511, %v513
    %v515 = vrot.slane %v501, %v514
    %v516 = vcombine.low %v508, %v515
    %v517 = vcombine.low %v456, %v457
    %v518 = vcombine.low %v458, %v459
    %v520 = vunpack.c.l.s4 1983009808
    %v521 = vunpack.c.0.s8 %v520
    %v522 = vlaneseq
    %v523 = vshrl.u32 %v522, 7
    %v524 = vsub.s32 %v521, %v523
    %v525 = vrot.slane %v517, %v524
    %v527 = vunpack.c.l.s4 1983009808
    %v528 = vunpack.c.0.s8 %v527
    %v529 = vlaneseq
    %v530 = vshrl.u32 %v529, 7
    %v531 = vsub.s32 %v528, %v530
    %v532 = vrot.slane %v518, %v531
    %v533 = vcombine.low %v525, %v532
    %v534 = vcombine.low %v460, %v461
    %v535 = vcombine.low %v462, %v463
    %v537 = vunpack.c.l.s4 1983009808
    %v538 = vunpack.c.0.s8 %v537
    %v539 = vlaneseq
    %v540 = vshrl.u32 %v539, 7
    %v541 = vsub.s32 %v538, %v540
    %v542 = vrot.slane %v534, %v541
    %v544 = vunpack.c.l.s4 1983009808
    %v545 = vunpack.c.0.s8 %v544
    %v546 = vlaneseq
    %v547 = vshrl.u32 %v546, 7
    %v548 = vsub.s32 %v545, %v547
    %v549 = vrot.slane %v535, %v548
    %v550 = vcombine.low %v542, %v549
    %v551 = vcombine.low %v464, %v465
    %v552 = vcombine.low %v466, %v467
    %v554 = vunpack.c.l.s4 1983009808
    %v555 = vunpack.c.0.s8 %v554
    %v556 = vlaneseq
    %v557 = vshrl.u32 %v556, 7
    %v558 = vsub.s32 %v555, %v557
    %v559 = vrot.slane %v551, %v558
    %v561 = vunpack.c.l.s4 1983009808
    %v562 = vunpack.c.0.s8 %v561
    %v563 = vlaneseq
    %v564 = vshrl.u32 %v563, 7
    %v565 = vsub.s32 %v562, %v564
    %v566 = vrot.slane %v552, %v565
    %v567 = vcombine.low %v559, %v566
    %v576 = vunpack.c.l.b16 %v476
    %v577 = vunpack.c.l.b16 %v477
    %v578 = vunpack.c.l.b16 %v478
    %v579 = vunpack.c.l.b16 %v479
    %v580 = vunpack.c.l.b16 %v480
    %v581 = vunpack.c.l.b16 %v481
    %v582 = vunpack.c.l.b16 %v482
    %v583 = vunpack.c.l.b16 %v483
    %v584 = vpack.c.b16 %v577, %v576
    %v585 = vpack.c.b16 %v579, %v578
    %v586 = vpack.c.b16 %v581, %v580
    %v587 = vpack.c.b16 %v583, %v582
    %vm592 = vcmask 523264
    %v594 = vsel %vm592, %v516, 0
    %v597 = vsel %vm592, %v533, 0
    %v600 = vsel %vm592, %v550, 0
    %v603 = vsel %vm592, %v567, 0
    %605 = vmatprep.subr.bf16.mxu0 0
    %606 = vmatpush1.bf16.msra.mxu0 %v584
    %607 = vmatprep.subr.bf16.mxu0 0
    %608 = vmatpush1.bf16.msra.mxu0 %v585
    %609 = vmatprep.subr.bf16.mxu0 0
    %610 = vmatpush1.bf16.msra.mxu0 %v586
    %611 = vmatprep.subr.bf16.mxu0 0
    %612 = vmatpush1.bf16.msra.mxu0 %v587
    %613 = vmatprep.subr.bf16.mxu0 0
    %614 = vmatpush1.bf16.msra.mxu0 0
    %615 = vmatprep.subr.bf16.mxu0 0
    %616 = vmatpush1.bf16.msra.mxu0 0
    %617 = vmatprep.subr.bf16.mxu0 0
    %618 = vmatpush1.bf16.msra.mxu0 0
    %619 = vmatprep.subr.bf16.mxu0 0
    %620 = vmatpush1.bf16.msra.mxu0 0
    %621 = vmatprep.subr.bf16.mxu0 0
    %622 = vmatpush1.bf16.msra.mxu0 0
    %623 = vmatprep.subr.bf16.mxu0 0
    %624 = vmatpush1.bf16.msra.mxu0 0
    %625 = vmatprep.subr.bf16.mxu0 0
    %626 = vmatpush1.bf16.msra.mxu0 0
    %627 = vmatprep.subr.bf16.mxu0 0
    %628 = vmatpush1.bf16.msra.mxu0 0
    %629 = vmatprep.subr.bf16.mxu0 0
    %630 = vmatpush1.bf16.msra.mxu0 0
    %631 = vmatprep.subr.bf16.mxu0 0
    %632 = vmatpush1.bf16.msra.mxu0 0
    %633 = vmatprep.subr.bf16.mxu0 0
    %634 = vmatpush1.bf16.msra.mxu0 0
    %635 = vmatprep.subr.bf16.mxu0 0
    %636 = vmatpush1.bf16.msra.mxu0 0
    %637 = vmatprep.mubr.bf16.mxu0 0
    %638 = vmatmul.mubr.bf16.gmra.mrb[0].mxu0 %v594
    %v639 = vpop.f32.mrb[0].mxu0
    %v640 = vadd.f32 0.0, %v639
    %v641 = vpop.f32.mrb[0].mxu0
    %v642 = vpop.f32.mrb[0].mxu0
    %v643 = vadd.f32 0.0, %v642
    %v644 = vpop.f32.mrb[0].mxu0
    %645 = vmatprep.mubr.bf16.mxu0 0
    %646 = vmatmul.mubr.bf16.gmra.mrb[0].mxu0 %v597
    %v647 = vpop.f32.mrb[0].mxu0
    %v648 = vadd.f32 0.0, %v647
    %v649 = vpop.f32.mrb[0].mxu0
    %v650 = vpop.f32.mrb[0].mxu0
    %v651 = vadd.f32 0.0, %v650
    %v652 = vpop.f32.mrb[0].mxu0
    %653 = vmatprep.mubr.bf16.mxu0 0
    %654 = vmatmul.mubr.bf16.gmra.mrb[0].mxu0 %v600
    %v655 = vpop.f32.mrb[0].mxu0
    %v656 = vadd.f32 0.0, %v655
    %v657 = vpop.f32.mrb[0].mxu0
    %v658 = vpop.f32.mrb[0].mxu0
    %v659 = vadd.f32 0.0, %v658
    %v660 = vpop.f32.mrb[0].mxu0
    %661 = vmatprep.mubr.bf16.mxu0 0
    %662 = vmatmul.mubr.bf16.gmra.mrb[0].mxu0 %v603
    %v663 = vpop.f32.mrb[0].mxu0
    %v664 = vadd.f32 0.0, %v663
    %v665 = vpop.f32.mrb[0].mxu0
    %v666 = vpop.f32.mrb[0].mxu0
    %v667 = vadd.f32 0.0, %v666
    %v668 = vpop.f32.mrb[0].mxu0
    %669 = vdwg.mxu0
    %v686 = vcombine.low %v420, %v421
    %v687 = vcombine.low %v422, %v423
    %v689 = vunpack.c.l.s4 1983009808
    %v690 = vunpack.c.0.s8 %v689
    %v691 = vlaneseq
    %v692 = vshrl.u32 %v691, 7
    %v693 = vsub.s32 %v690, %v692
    %v694 = vrot.slane %v686, %v693
    %v696 = vunpack.c.l.s4 1983009808
    %v697 = vunpack.c.0.s8 %v696
    %v698 = vlaneseq
    %v699 = vshrl.u32 %v698, 7
    %v700 = vsub.s32 %v697, %v699
    %v701 = vrot.slane %v687, %v700
    %v702 = vcombine.low %v694, %v701
    %v703 = vcombine.low %v424, %v425
    %v704 = vcombine.low %v426, %v427
    %v706 = vunpack.c.l.s4 1983009808
    %v707 = vunpack.c.0.s8 %v706
    %v708 = vlaneseq
    %v709 = vshrl.u32 %v708, 7
    %v710 = vsub.s32 %v707, %v709
    %v711 = vrot.slane %v703, %v710
    %v713 = vunpack.c.l.s4 1983009808
    %v714 = vunpack.c.0.s8 %v713
    %v715 = vlaneseq
    %v716 = vshrl.u32 %v715, 7
    %v717 = vsub.s32 %v714, %v716
    %v718 = vrot.slane %v704, %v717
    %v719 = vcombine.low %v711, %v718
    %v720 = vcombine.low %v428, %v429
    %v721 = vcombine.low %v430, %v431
    %v723 = vunpack.c.l.s4 1983009808
    %v724 = vunpack.c.0.s8 %v723
    %v725 = vlaneseq
    %v726 = vshrl.u32 %v725, 7
    %v727 = vsub.s32 %v724, %v726
    %v728 = vrot.slane %v720, %v727
    %v730 = vunpack.c.l.s4 1983009808
    %v731 = vunpack.c.0.s8 %v730
    %v732 = vlaneseq
    %v733 = vshrl.u32 %v732, 7
    %v734 = vsub.s32 %v731, %v733
    %v735 = vrot.slane %v721, %v734
    %v736 = vcombine.low %v728, %v735
    %v737 = vcombine.low %v432, %v433
    %v738 = vcombine.low %v434, %v435
    %v740 = vunpack.c.l.s4 1983009808
    %v741 = vunpack.c.0.s8 %v740
    %v742 = vlaneseq
    %v743 = vshrl.u32 %v742, 7
    %v744 = vsub.s32 %v741, %v743
    %v745 = vrot.slane %v737, %v744
    %v747 = vunpack.c.l.s4 1983009808
    %v748 = vunpack.c.0.s8 %v747
    %v749 = vlaneseq
    %v750 = vshrl.u32 %v749, 7
    %v751 = vsub.s32 %v748, %v750
    %v752 = vrot.slane %v738, %v751
    %v753 = vcombine.low %v745, %v752
    %v762 = vunpack.c.l.b16 %v468
    %v763 = vunpack.c.l.b16 %v469
    %v764 = vunpack.c.l.b16 %v470
    %v765 = vunpack.c.l.b16 %v471
    %v766 = vunpack.c.l.b16 %v472
    %v767 = vunpack.c.l.b16 %v473
    %v768 = vunpack.c.l.b16 %v474
    %v769 = vunpack.c.l.b16 %v475
    %v770 = vpack.c.b16 %v763, %v762
    %v771 = vpack.c.b16 %v765, %v764
    %v772 = vpack.c.b16 %v767, %v766
    %v773 = vpack.c.b16 %v769, %v768
    %v779 = vsel %vm592, %v702, 0
    %v782 = vsel %vm592, %v719, 0
    %v785 = vsel %vm592, %v736, 0
    %v788 = vsel %vm592, %v753, 0
    %790 = vmatprep.subr.bf16.mxu0 0
    %791 = vmatpush1.bf16.msra.mxu0 %v770
    %792 = vmatprep.subr.bf16.mxu0 0
    %793 = vmatpush1.bf16.msra.mxu0 %v771
    %794 = vmatprep.subr.bf16.mxu0 0
    %795 = vmatpush1.bf16.msra.mxu0 %v772
    %796 = vmatprep.subr.bf16.mxu0 0
    %797 = vmatpush1.bf16.msra.mxu0 %v773
    %798 = vmatprep.subr.bf16.mxu0 0
    %799 = vmatpush1.bf16.msra.mxu0 0
    %800 = vmatprep.subr.bf16.mxu0 0
    %801 = vmatpush1.bf16.msra.mxu0 0
    %802 = vmatprep.subr.bf16.mxu0 0
    %803 = vmatpush1.bf16.msra.mxu0 0
    %804 = vmatprep.subr.bf16.mxu0 0
    %805 = vmatpush1.bf16.msra.mxu0 0
    %806 = vmatprep.subr.bf16.mxu0 0
    %807 = vmatpush1.bf16.msra.mxu0 0
    %808 = vmatprep.subr.bf16.mxu0 0
    %809 = vmatpush1.bf16.msra.mxu0 0
    %810 = vmatprep.subr.bf16.mxu0 0
    %811 = vmatpush1.bf16.msra.mxu0 0
    %812 = vmatprep.subr.bf16.mxu0 0
    %813 = vmatpush1.bf16.msra.mxu0 0
    %814 = vmatprep.subr.bf16.mxu0 0
    %815 = vmatpush1.bf16.msra.mxu0 0
    %816 = vmatprep.subr.bf16.mxu0 0
    %817 = vmatpush1.bf16.msra.mxu0 0
    %818 = vmatprep.subr.bf16.mxu0 0
    %819 = vmatpush1.bf16.msra.mxu0 0
    %820 = vmatprep.subr.bf16.mxu0 0
    %821 = vmatpush1.bf16.msra.mxu0 0
    %822 = vmatprep.mubr.bf16.mxu0 0
    %823 = vmatmul.mubr.bf16.gmra.mrb[0].mxu0 %v779
    %v824 = vpop.f32.mrb[0].mxu0
    %v825 = vadd.f32 %v640, %v824
    %v826 = vpop.f32.mrb[0].mxu0
    %v827 = vpop.f32.mrb[0].mxu0
    %v828 = vadd.f32 %v643, %v827
    %v829 = vpop.f32.mrb[0].mxu0
    %830 = vmatprep.mubr.bf16.mxu0 0
    %831 = vmatmul.mubr.bf16.gmra.mrb[0].mxu0 %v782
    %v832 = vpop.f32.mrb[0].mxu0
    %v833 = vadd.f32 %v648, %v832
    %v834 = vpop.f32.mrb[0].mxu0
    %v835 = vpop.f32.mrb[0].mxu0
    %v836 = vadd.f32 %v651, %v835
    %v837 = vpop.f32.mrb[0].mxu0
    %838 = vmatprep.mubr.bf16.mxu0 0
    %839 = vmatmul.mubr.bf16.gmra.mrb[0].mxu0 %v785
    %v840 = vpop.f32.mrb[0].mxu0
    %v841 = vadd.f32 %v656, %v840
    %v842 = vpop.f32.mrb[0].mxu0
    %v843 = vpop.f32.mrb[0].mxu0
    %v844 = vadd.f32 %v659, %v843
    %v845 = vpop.f32.mrb[0].mxu0
    %846 = vmatprep.mubr.bf16.mxu0 0
    %847 = vmatmul.mubr.bf16.gmra.mrb[0].mxu0 %v788
    %v848 = vpop.f32.mrb[0].mxu0
    %v849 = vadd.f32 %v664, %v848
    %v850 = vpop.f32.mrb[0].mxu0
    %v851 = vpop.f32.mrb[0].mxu0
    %v852 = vadd.f32 %v667, %v851
    %v853 = vpop.f32.mrb[0].mxu0
    %854 = vdwg.mxu0
    %v855 = vld [vmem:[%s3] sm:$0x1]
    %v857 = vlaneseq
    %v858 = vshrl.u32 %v857, 7
    %v859 = vsub.s32 0, %v858
    %v860 = vrot.slane %v855, %v859
    %v862 = vadd.f32 %v825, %v860
    %v863 = vadd.f32 %v828, %v860
    %v864 = vadd.f32 %v833, %v860
    %v865 = vadd.f32 %v836, %v860
    %v866 = vadd.f32 %v841, %v860
    %v867 = vadd.f32 %v844, %v860
    %v868 = vadd.f32 %v849, %v860
    %v869 = vadd.f32 %v852, %v860
    %870 = vst.msk [vmem:[#allocation2] sm:$0xff] %vm592, %v862
    %871 = vst.msk [vmem:[#allocation2 + $0x8] sm:$0xff] %vm592, %v863
    %872 = vst.msk [vmem:[#allocation2 + $0x10] sm:$0xff] %vm592, %v864
    %873 = vst.msk [vmem:[#allocation2 + $0x18] sm:$0xff] %vm592, %v865
    %874 = vst.msk [vmem:[#allocation2 + $0x20] sm:$0xff] %vm592, %v866
    %875 = vst.msk [vmem:[#allocation2 + $0x28] sm:$0xff] %vm592, %v867
    %876 = vst.msk [vmem:[#allocation2 + $0x30] sm:$0xff] %vm592, %v868
    %877 = vst.msk [vmem:[#allocation2 + $0x38] sm:$0xff] %vm592, %v869
    // Predicated region
    $region18: #{patch_merging_forward.1} parent=1 // pred_check
      _
    $region19: #{patch_merging_forward.1} parent=1 // pred_check_branch
      %879 = sbr.rel (0) target = $region21
    $region20: #{patch_merging_forward.1} parent=1 // pred_region
      %s881 = ssub.s32 1024, 1024
      %882 = vsyncadd [#allocation3], %s881
      %s883 = sshll.u32 [#allocation2], 4
      %s884 = int_to_ptr.vmem [resolvable:$true] %s883
      %889 = dma.vmem_to_hbm [thread:$0]  %s884, 1024, %s4, [#allocation3], 128, 128, 8
    $region21: #{patch_merging_forward.1} parent=1 // pred_fallthru
      _
    // Predicated region
    $region22: #{patch_merging_forward.1} parent=1 // pred_check
      _
    $region23: #{patch_merging_forward.1} parent=1 // pred_check_branch
      %891 = sbr.rel (0) target = $region25
    $region24: #{patch_merging_forward.1} parent=1 // pred_region
      %892 = dma.done [#allocation3], 1024
    $region25: #{patch_merging_forward.1} parent=1 // pred_fallthru
      _
    %893 = vsyncpa [#allocation3], 1

</llo_original>
